<compile_context>
chip_gen: v7x
topology: tpu7x:2x2x1
jax: 0.10.0
libtpu: 0.0.40
codegen_flags: <defaults>
</compile_context>

<pallas_src>
import functools

import jax
import jax.numpy as jnp
from jax.experimental import pallas as pl
from jax.experimental.pallas import tpu as pltpu

CIN, COUT, KH, KW = 3, 6, 3, 3


def _conv_kernel(x_ref, w_ref, o_ref, *, B, W, Ho):
    """Fused 3x3 valid conv for B images packed into the sublane axis.

    x_ref: (B*CIN, H*W + KW-1)   f32  flat row-major images, +2 zero pad cols
    w_ref: (COUT, KH*KW*CIN + 1) f32  tap-major weights, bias as last column
    o_ref: (B*COUT, Ho*W)        f32  full-width output rows (wrapped columns
                                      are stripped by the wrapper's slice)
    """
    Lf = Ho * W                                   # full-width flat output length
    w = w_ref[...]                                # (6, 28), resident across steps
    ones_row = jnp.ones((1, Lf), jnp.float32)     # bias row, hoisted out of loop

    for n in range(B):                            # B kept modest (<= 8) by wrapper
        r0 = n * CIN
        x2d = x_ref[r0:r0 + CIN, :]               # (3, H*W + 2)

        # 9 conv taps == 9 contiguous lane-offset windows of the flat image.
        # Stack them (tap-major, channel within) + the ones row into a single
        # (28, Lf) slab and run ONE MXU matmul (6,28)@(28,Lf), f32 accumulate.
        rows = [x2d[:, kh * W + kw: kh * W + kw + Lf]
                for kh in range(KH) for kw in range(KW)]
        rows.append(ones_row)
        slab = jnp.concatenate(rows, axis=0)      # (28, Lf)

        out = jnp.dot(w, slab, preferred_element_type=jnp.float32)  # (6, Lf)

        # Single dense lane-wide store per image (no masked per-row compaction).
        o_ref[n * COUT:(n + 1) * COUT, :] = out.astype(o_ref.dtype)


def onenet_forward(x_nchw, w_oihw, bias):
    """Conv2d(3, 6, kernel_size=3), stride 1, no padding (PyTorch semantics).

    x_nchw: (N, 3, H, W) f32; w_oihw: (6, 3, 3, 3) PyTorch OIHW; bias: (6,).
    Returns (N, 6, H-2, W-2) f32.
    """
    N, C, H, W = x_nchw.shape
    assert C == CIN and H >= KH and W >= KW
    Ho, Wo = H - KH + 1, W - KW + 1
    HWp = H * W + (KW - 1)   # flat image + 2 pad cols so full-width taps stay in bounds

    # --- Grid / block policy --------------------------------------------------
    # Small N: a single grid step (no per-step overhead; block == full array so
    # the sublane dim needs no 8-alignment).  Large N: B = 8 images per step so
    # the 2-D batch-in-sublane blocks are (8,128)-tile aligned; pad batch if N
    # is not a multiple of 8.  For very large H*W, B should additionally be
    # bounded by the per-generation VMEM budget (pltpu.get_tpu_info()).
    B_MAX = 8
    if N <= B_MAX:
        B, n_pad = N, N
    else:
        B = B_MAX
        n_pad = ((N + B - 1) // B) * B
    grid_n = n_pad // B

    # --- Operand packing (contiguous reshapes + tiny one-time repacks) --------
    # Flat, lane-dense images with batch folded into the sublane axis; the pad
    # appends 2 zero columns per image (and zero images if the batch was padded).
    x_flat = jnp.pad(x_nchw.reshape(N, CIN, H * W),
                     ((0, n_pad - N), (0, 0), (0, KW - 1)))
    x_flat = x_flat.reshape(n_pad * CIN, HWp)
    # Tap-major (6, 27) weight with the bias fused in as a 28th column.
    w2d = jnp.transpose(w_oihw, (0, 2, 3, 1)).reshape(COUT, KH * KW * CIN)
    w_full = jnp.concatenate([w2d, bias.reshape(COUT, 1)], axis=1)   # (6, 28)

    kernel = functools.partial(_conv_kernel, B=B, W=W, Ho=Ho)

    y2d = pl.pallas_call(
        kernel,
        out_shape=jax.ShapeDtypeStruct((n_pad * COUT, Ho * W), x_nchw.dtype),
        grid=(grid_n,),
        in_specs=[
            pl.BlockSpec((B * CIN, HWp), lambda n: (n, 0)),
            pl.BlockSpec((COUT, KH * KW * CIN + 1), lambda n: (0, 0)),
        ],
        out_specs=pl.BlockSpec((B * COUT, Ho * W), lambda n: (n, 0)),
        compiler_params=pltpu.CompilerParams(
            dimension_semantics=("parallel",)),
    )(x_flat, w_full)

    # Free reshape back to image layout, then strip padded images and the KW-1
    # wrapped columns per output row.
    return y2d.reshape(n_pad, COUT, Ho, W)[:N, :, :, :Wo]


if __name__ == "__main__":
    key = jax.random.PRNGKey(0)
    kx, kw, kb = jax.random.split(key, 3)

    # Deterministic synthetic parameters (shapes from Conv2d(3, 6, 3)),
    # weight kept in PyTorch OIHW layout.
    w_oihw = jax.random.normal(kw, (COUT, CIN, KH, KW), jnp.float32) * 0.1
    bias = jax.random.normal(kb, (COUT,), jnp.float32) * 0.1

    # Small input consistent with the module: batch=2, 3 channels, 16x16.
    x = jax.random.normal(kx, (2, 3, 16, 16), jnp.float32)

    y = onenet_forward(x, w_oihw, bias)
    y = jax.block_until_ready(y)

    # Reference: XLA conv with the same semantics as torch Conv2d (valid padding).
    y_ref = jax.lax.conv_general_dilated(
        x, w_oihw, window_strides=(1, 1), padding="VALID",
        dimension_numbers=("NCHW", "OIHW", "NCHW"),
    ) + bias.reshape(1, COUT, 1, 1)

    assert y.shape == (2, 6, 14, 14), y.shape
    assert jnp.allclose(y, y_ref, atol=1e-4, rtol=1e-4), float(jnp.max(jnp.abs(y - y_ref)))

    print("KERNEL_OK")
</pallas_src>

<mosaic_0001>
module attributes {stable_mosaic.version = 11 : i64} {
  func.func @_conv_kernel(%arg0: i32, %arg1: memref<6x258xf32, #tpu.memory_space<vmem>>, %arg2: memref<6x28xf32, #tpu.memory_space<vmem>>, %arg3: memref<12x224xf32, #tpu.memory_space<vmem>>) attributes {dimension_semantics = [#tpu.dimension_semantics<parallel>], iteration_bounds = array<i64: 1>, scalar_prefetch = 0 : i64, scratch_operands = 0 : i64, tpu.core_type = #tpu.core_type<tc>, window_params = [{transform_indices = @transform_0, window_bounds = array<i64: 6, 258>}, {pipeline_mode = #tpu.pipeline_mode<synchronous>, transform_indices = @transform_1, window_bounds = array<i64: 6, 28>}, {transform_indices = @transform_2, window_bounds = array<i64: 12, 224>}]} {
    %c0 = arith.constant 0 : index
    %c0_0 = arith.constant 0 : index
    %0 = vector.load %arg2[%c0, %c0_0] : memref<6x28xf32, #tpu.memory_space<vmem>>, vector<6x28xf32>
    %cst = arith.constant 1.000000e+00 : f32
    %1 = vector.broadcast %cst : f32 to vector<1x224xf32>
    %c0_1 = arith.constant 0 : index
    %c0_2 = arith.constant 0 : index
    %2 = vector.load %arg1[%c0_1, %c0_2] : memref<6x258xf32, #tpu.memory_space<vmem>>, vector<3x258xf32>
    %3 = vector.extract_strided_slice %2 {offsets = [0, 0], sizes = [3, 224], strides = [1, 1]} : vector<3x258xf32> to vector<3x224xf32>
    %4 = vector.extract_strided_slice %2 {offsets = [0, 1], sizes = [3, 224], strides = [1, 1]} : vector<3x258xf32> to vector<3x224xf32>
    %5 = vector.extract_strided_slice %2 {offsets = [0, 2], sizes = [3, 224], strides = [1, 1]} : vector<3x258xf32> to vector<3x224xf32>
    %6 = vector.extract_strided_slice %2 {offsets = [0, 16], sizes = [3, 224], strides = [1, 1]} : vector<3x258xf32> to vector<3x224xf32>
    %7 = vector.extract_strided_slice %2 {offsets = [0, 17], sizes = [3, 224], strides = [1, 1]} : vector<3x258xf32> to vector<3x224xf32>
    %8 = vector.extract_strided_slice %2 {offsets = [0, 18], sizes = [3, 224], strides = [1, 1]} : vector<3x258xf32> to vector<3x224xf32>
    %9 = vector.extract_strided_slice %2 {offsets = [0, 32], sizes = [3, 224], strides = [1, 1]} : vector<3x258xf32> to vector<3x224xf32>
    %10 = vector.extract_strided_slice %2 {offsets = [0, 33], sizes = [3, 224], strides = [1, 1]} : vector<3x258xf32> to vector<3x224xf32>
    %11 = vector.extract_strided_slice %2 {offsets = [0, 34], sizes = [3, 224], strides = [1, 1]} : vector<3x258xf32> to vector<3x224xf32>
    %12 = tpu.concatenate %3, %4, %5, %6, %7, %8, %9, %10, %11, %1 in 0 : vector<3x224xf32>, vector<3x224xf32>, vector<3x224xf32>, vector<3x224xf32>, vector<3x224xf32>, vector<3x224xf32>, vector<3x224xf32>, vector<3x224xf32>, vector<3x224xf32>, vector<1x224xf32> -> vector<28x224xf32>
    %cst_3 = arith.constant dense<0.000000e+00> : vector<6x224xf32>
    %13 = tpu.matmul %0, %12, %cst_3 {dimension_numbers = #tpu.dot_dimension_numbers<[1], [0], [0], [1], [0, 0, 1, 1], [], []>} : vector<6x28xf32>, vector<28x224xf32>, vector<6x224xf32> -> vector<6x224xf32>
    %c0_4 = arith.constant 0 : index
    %c0_5 = arith.constant 0 : index
    %14 = vector.load %arg3[%c0_4, %c0_5] : memref<12x224xf32, #tpu.memory_space<vmem>>, vector<6x224xf32>
    tpu.vector_store %arg3[%c0_4, %c0_5], %13 {strides = array<i32>} : memref<12x224xf32, #tpu.memory_space<vmem>>, vector<6x224xf32>,
    %c3 = arith.constant 3 : index
    %c0_6 = arith.constant 0 : index
    %15 = vector.load %arg1[%c3, %c0_6] : memref<6x258xf32, #tpu.memory_space<vmem>>, vector<3x258xf32>
    %16 = vector.extract_strided_slice %15 {offsets = [0, 0], sizes = [3, 224], strides = [1, 1]} : vector<3x258xf32> to vector<3x224xf32>
    %17 = vector.extract_strided_slice %15 {offsets = [0, 1], sizes = [3, 224], strides = [1, 1]} : vector<3x258xf32> to vector<3x224xf32>
    %18 = vector.extract_strided_slice %15 {offsets = [0, 2], sizes = [3, 224], strides = [1, 1]} : vector<3x258xf32> to vector<3x224xf32>
    %19 = vector.extract_strided_slice %15 {offsets = [0, 16], sizes = [3, 224], strides = [1, 1]} : vector<3x258xf32> to vector<3x224xf32>
    %20 = vector.extract_strided_slice %15 {offsets = [0, 17], sizes = [3, 224], strides = [1, 1]} : vector<3x258xf32> to vector<3x224xf32>
    %21 = vector.extract_strided_slice %15 {offsets = [0, 18], sizes = [3, 224], strides = [1, 1]} : vector<3x258xf32> to vector<3x224xf32>
    %22 = vector.extract_strided_slice %15 {offsets = [0, 32], sizes = [3, 224], strides = [1, 1]} : vector<3x258xf32> to vector<3x224xf32>
    %23 = vector.extract_strided_slice %15 {offsets = [0, 33], sizes = [3, 224], strides = [1, 1]} : vector<3x258xf32> to vector<3x224xf32>
    %24 = vector.extract_strided_slice %15 {offsets = [0, 34], sizes = [3, 224], strides = [1, 1]} : vector<3x258xf32> to vector<3x224xf32>
    %25 = tpu.concatenate %16, %17, %18, %19, %20, %21, %22, %23, %24, %1 in 0 : vector<3x224xf32>, vector<3x224xf32>, vector<3x224xf32>, vector<3x224xf32>, vector<3x224xf32>, vector<3x224xf32>, vector<3x224xf32>, vector<3x224xf32>, vector<3x224xf32>, vector<1x224xf32> -> vector<28x224xf32>
    %cst_7 = arith.constant dense<0.000000e+00> : vector<6x224xf32>
    %26 = tpu.matmul %0, %25, %cst_7 {dimension_numbers = #tpu.dot_dimension_numbers<[1], [0], [0], [1], [0, 0, 1, 1], [], []>} : vector<6x28xf32>, vector<28x224xf32>, vector<6x224xf32> -> vector<6x224xf32>
    %c6 = arith.constant 6 : index
    %c0_8 = arith.constant 0 : index
    %27 = vector.load %arg3[%c6, %c0_8] : memref<12x224xf32, #tpu.memory_space<vmem>>, vector<6x224xf32>
    tpu.vector_store %arg3[%c6, %c0_8], %26 {strides = array<i32>} : memref<12x224xf32, #tpu.memory_space<vmem>>, vector<6x224xf32>,
    return
  }
  func.func @transform_0(%arg0: i32) -> (i32, i32) {
    %c0_i32 = arith.constant 0 : i32
    %c0_i32_0 = arith.constant 0 : i32
    return %arg0, %c0_i32 : i32, i32
  }
  func.func @transform_1(%arg0: i32) -> (i32, i32) {
    %c0_i32 = arith.constant 0 : i32
    %c0_i32_0 = arith.constant 0 : i32
    %c0_i32_1 = arith.constant 0 : i32
    return %c0_i32, %c0_i32_0 : i32, i32
  }
  func.func @transform_2(%arg0: i32) -> (i32, i32) {
    %c0_i32 = arith.constant 0 : i32
    %c0_i32_0 = arith.constant 0 : i32
    return %arg0, %c0_i32 : i32, i32
  }
}

</mosaic_0001>

<llo_original>
// kernel: tpu_custom_call.1
$region0: #{tpu_custom_call.1}
  #allocation0 [shape = 'u32[]', space=smem, size = 0x4, offset = 0x4, fixed_abs, tag = 'smem constant byte address 0x4 - core index']
  #allocation1 [shape = 'u32[144,128]{1,0:T(1,128)}', space=vmem, size = 0x12000, scoped, tag = 'internal scratch']
  %s0 = inlined_call_operand.hbm [shape: f32[6,258], index: 0, kind: input, shape index: {}]
  %s1 = inlined_call_operand.hbm [shape: f32[6,28], index: 1, kind: input, shape index: {}]
  %s2 = inlined_call_operand.hbm [shape: f32[12,224], index: 2, kind: output, shape index: {}]
  %s3 = sld [smem:[#allocation0]]
  $region26: #{tpu_custom_call.1} parent=0
    _
  %s5 = ssub.s32 1, %s3
  %s6 = scalar_select 0, %s5, %s3
  $region1: #{tpu_custom_call.1} parent=0
    #allocation2 [shape = 'u8[12288]{0}', space=vmem, size = 0x3000, scoped, tag = 'input window, operand 0, single buffered']
    #allocation3 [shape = 's32[1]{0}', space=sflag, size = 0x4, scoped, tag = 'scoped memory for tpu_custom_call.1']
    #allocation4 [shape = 's32[1]{0}', space=sflag, size = 0x4, scoped, tag = 'scoped memory for tpu_custom_call.1']
    #allocation5 [shape = 'u8[4096]{0}', space=vmem, size = 0x1000, scoped, tag = 'input window, operand 1, single buffered']
    #allocation6 [shape = 's32[1]{0}', space=sflag, size = 0x4, scoped, tag = 'scoped memory for tpu_custom_call.1']
    #allocation7 [shape = 'u8[16384]{0}', space=vmem, size = 0x4000, scoped, tag = 'output window, operand 0, single buffered']
    %7 = vsyncpa [#allocation3], 0
    %8 = vsyncpa [#allocation6], 0
    %9 = vsyncpa [#allocation4], 0
    // Predicated region
    $region2: #{tpu_custom_call.1} parent=1 // pred_check
      _
    $region3: #{tpu_custom_call.1} parent=1 // pred_check_branch
      %11 = sbr.rel (0) target = $region5
    $region4: #{tpu_custom_call.1} parent=1 // pred_region
      %s13 = ssub.s32 384, 384
      %14 = vsyncadd [#allocation3], %s13
      %s16 = sshll.u32 [#allocation2], 4
      %s17 = int_to_ptr.vmem [resolvable:$true] %s16
      %19 = dma.hbm_to_vmem [thread:$0]  %s0, 384, %s17, [#allocation3]
    $region5: #{tpu_custom_call.1} parent=1 // pred_fallthru
      _
    // Predicated region
    $region6: #{tpu_custom_call.1} parent=1 // pred_check
      _
    $region7: #{tpu_custom_call.1} parent=1 // pred_check_branch
      %21 = sbr.rel (0) target = $region9
    $region8: #{tpu_custom_call.1} parent=1 // pred_region
      %s23 = ssub.s32 128, 128
      %24 = vsyncadd [#allocation6], %s23
      %s26 = sshll.u32 [#allocation5], 4
      %s27 = int_to_ptr.vmem [resolvable:$true] %s26
      %29 = dma.hbm_to_vmem [thread:$0]  %s1, 128, %s27, [#allocation6]
    $region9: #{tpu_custom_call.1} parent=1 // pred_fallthru
      _
    // Predicated region
    $region10: #{tpu_custom_call.1} parent=1 // pred_check
      _
    $region11: #{tpu_custom_call.1} parent=1 // pred_check_branch
      %31 = sbr.rel (0) target = $region13
    $region12: #{tpu_custom_call.1} parent=1 // pred_region
      %32 = dma.done [#allocation3], 384
    $region13: #{tpu_custom_call.1} parent=1 // pred_fallthru
      _
    // Predicated region
    $region14: #{tpu_custom_call.1} parent=1 // pred_check
      _
    $region15: #{tpu_custom_call.1} parent=1 // pred_check_branch
      %34 = sbr.rel (0) target = $region17
    $region16: #{tpu_custom_call.1} parent=1 // pred_region
      %35 = dma.done [#allocation6], 128
    $region17: #{tpu_custom_call.1} parent=1 // pred_fallthru
      _
    %v36 = vld [vmem:[#allocation5] sm:$0x3f]
    %v37 = vld [vmem:[#allocation2] sm:$0x7]
    %v38 = vld [vmem:[#allocation2 + $0x8] sm:$0x7]
    %v39 = vld [vmem:[#allocation2 + $0x10] sm:$0x7]
    %v42 = vrot.slane %v37, 5
    %v43 = vrot.slane %v38, 5
    %44 = vrot.lane.b32.xlu0 %v42, 127
    %v45 = vpop.permute.xlu0 %44
    %46 = vrot.lane.b32.xlu0 %v43, 127
    %v47 = vpop.permute.xlu0 %46
    %vm48 = vcmask 1039360
    %v49 = vsel %vm48, %v45, %v47
    %v52 = vrot.slane %v37, 2
    %v53 = vrot.slane %v38, 2
    %54 = vrot.lane.b32.xlu0 %v52, 126
    %v55 = vpop.permute.xlu0 %54
    %56 = vrot.lane.b32.xlu0 %v53, 126
    %v57 = vpop.permute.xlu0 %56
    %vm58 = vcmask 1031168
    %v59 = vsel %vm58, %v55, %v57
    %v62 = vrot.slane %v37, 7
    %v63 = vrot.slane %v38, 7
    %64 = vrot.lane.b32.xlu0 %v62, 112
    %v65 = vpop.permute.xlu0 %64
    %66 = vrot.lane.b32.xlu0 %v63, 112
    %v67 = vpop.permute.xlu0 %66
    %vm68 = vcmask 916480
    %v69 = vsel %vm68, %v65, %v67
    %v72 = vrot.slane %v37, 4
    %v73 = vrot.slane %v38, 4
    %74 = vrot.lane.b32.xlu0 %v72, 111
    %v75 = vpop.permute.xlu0 %74
    %76 = vrot.lane.b32.xlu0 %v73, 111
    %v77 = vpop.permute.xlu0 %76
    %vm78 = vcmask 908288
    %v79 = vsel %vm78, %v75, %v77
    %v82 = vrot.slane %v37, 1
    %v83 = vrot.slane %v38, 1
    %84 = vrot.lane.b32.xlu0 %v82, 110
    %v85 = vpop.permute.xlu0 %84
    %86 = vrot.lane.b32.xlu0 %v83, 110
    %v87 = vpop.permute.xlu0 %86
    %vm88 = vcmask 900096
    %v89 = vsel %vm88, %v85, %v87
    %v92 = vrot.slane %v37, 6
    %v93 = vrot.slane %v38, 6
    %94 = vrot.lane.b32.xlu0 %v92, 96
    %v95 = vpop.permute.xlu0 %94
    %96 = vrot.lane.b32.xlu0 %v93, 96
    %v97 = vpop.permute.xlu0 %96
    %vm98 = vcmask 785408
    %v99 = vsel %vm98, %v95, %v97
    %v103 = vrot.slane %v37, 3
    %v104 = vrot.slane %v38, 3
    %v105 = vrot.slane %v39, 3
    %106 = vrot.lane.b32.xlu0 %v103, 95
    %v107 = vpop.permute.xlu0 %106
    %108 = vrot.lane.b32.xlu0 %v104, 95
    %v109 = vpop.permute.xlu0 %108
    %110 = vrot.lane.b32.xlu0 %v105, 95
    %v111 = vpop.permute.xlu0 %110
    %vm112 = vcmask 777216
    %v113 = vsel %vm112, %v107, %v109
    %v114 = vsel %vm112, %v109, %v111
    %117 = vrot.lane.b32.xlu0 %v37, 94
    %v118 = vpop.permute.xlu0 %117
    %119 = vrot.lane.b32.xlu0 %v38, 94
    %v120 = vpop.permute.xlu0 %119
    %121 = vrot.lane.b32.xlu0 %v39, 94
    %v122 = vpop.permute.xlu0 %121
    %vm123 = vcmask 769024
    %v124 = vsel %vm123, %v118, %v120
    %v125 = vsel %vm123, %v120, %v122
    %vm128 = vcmask 1042432
    %v129 = vsel %vm128, %v37, %v49
    %v130 = vsel %vm128, %v38, %v47
    %vm131 = vcmask 1045504
    %v132 = vsel %vm131, %v129, %v59
    %v133 = vsel %vm131, %v130, %v57
    %vm134 = vcmask 1040384
    %v135 = vsel %vm134, %v59, %v69
    %v136 = vsel %vm134, %v57, %v67
    %vm137 = vcmask 1043456
    %v138 = vsel %vm137, %v135, %v79
    %v139 = vsel %vm137, %v136, %v77
    %vm140 = vcmask 1046528
    %v141 = vsel %vm140, %v138, %v89
    %v142 = vsel %vm140, %v139, %v87
    %vm143 = vcmask 1041408
    %v144 = vsel %vm143, %v89, %v99
    %v145 = vsel %vm143, %v87, %v97
    %vm146 = vcmask 1044480
    %v147 = vsel %vm146, %v144, %v113
    %v148 = vsel %vm146, %v145, %v114
    %v149 = vsel %vm128, %v124, 1.0
    %v150 = vsel %vm128, %v125, 1.0
    %vm151 = vcmask 228352
    %v153 = vsel %vm151, %v36, 0
    %v156 = vsel %vm137, %v149, 0
    %v159 = vsel %vm137, %v150, 0
    %161 = vmatprep.subr.mxu0 %v133
    %162 = vmatpush1.msra.mxu0 %v132
    %163 = vmatprep.subr.mxu0 %v142
    %164 = vmatpush1.msra.mxu0 %v141
    %165 = vmatprep.subr.mxu0 %v148
    %166 = vmatpush1.msra.mxu0 %v147
    %167 = vmatprep.subr.mxu0 %v159
    %168 = vmatpush1.msra.mxu0 %v156
    %169 = vmatprep.subr.mxu0 0.0
    %170 = vmatpush1.msra.mxu0 0.0
    %171 = vmatprep.subr.mxu0 0.0
    %172 = vmatpush1.msra.mxu0 0.0
    %173 = vmatprep.subr.mxu0 0.0
    %174 = vmatpush1.msra.mxu0 0.0
    %175 = vmatprep.subr.mxu0 0.0
    %176 = vmatpush1.msra.mxu0 0.0
    %177 = vmatprep.subr.mxu0 0.0
    %178 = vmatpush1.msra.mxu0 0.0
    %179 = vmatprep.subr.mxu0 0.0
    %180 = vmatpush1.msra.mxu0 0.0
    %181 = vmatprep.subr.mxu0 0.0
    %182 = vmatpush1.msra.mxu0 0.0
    %183 = vmatprep.subr.mxu0 0.0
    %184 = vmatpush1.msra.mxu0 0.0
    %185 = vmatprep.subr.mxu0 0.0
    %186 = vmatpush1.msra.mxu0 0.0
    %187 = vmatprep.subr.mxu0 0.0
    %188 = vmatpush1.msra.mxu0 0.0
    %189 = vmatprep.subr.mxu0 0.0
    %190 = vmatpush1.msra.mxu0 0.0
    %191 = vmatprep.subr.mxu0 0.0
    %192 = vmatpush1.msra.mxu0 0.0
    %193 = vmatprep.subr.mxu0 0.0
    %194 = vmatpush1.msra.mxu0 0.0
    %195 = vmatprep.subr.mxu0 0.0
    %196 = vmatpush1.msra.mxu0 0.0
    %197 = vmatprep.subr.mxu0 0.0
    %198 = vmatpush1.msra.mxu0 0.0
    %199 = vmatprep.subr.mxu0 0.0
    %200 = vmatpush1.msra.mxu0 0.0
    %201 = vmatprep.subr.mxu0 0.0
    %202 = vmatpush1.msra.mxu0 0.0
    %203 = vmatprep.subr.mxu0 0.0
    %204 = vmatpush1.msra.mxu0 0.0
    %205 = vmatprep.subr.mxu0 0.0
    %206 = vmatpush1.msra.mxu0 0.0
    %207 = vmatprep.subr.mxu0 0.0
    %208 = vmatpush1.msra.mxu0 0.0
    %209 = vmatprep.subr.mxu0 0.0
    %210 = vmatpush1.msra.mxu0 0.0
    %211 = vmatprep.subr.mxu0 0.0
    %212 = vmatpush1.msra.mxu0 0.0
    %213 = vmatprep.subr.mxu0 0.0
    %214 = vmatpush1.msra.mxu0 0.0
    %215 = vmatprep.subr.mxu0 0.0
    %216 = vmatpush1.msra.mxu0 0.0
    %217 = vmatprep.subr.mxu0 0.0
    %218 = vmatpush1.msra.mxu0 0.0
    %219 = vmatprep.subr.mxu0 0.0
    %220 = vmatpush1.msra.mxu0 0.0
    %221 = vmatprep.subr.mxu0 0.0
    %222 = vmatpush1.msra.mxu0 0.0
    %223 = vmatprep.subr.mxu0 0.0
    %224 = vmatpush1.msra.mxu0 0.0
    %225 = vmatprep.mubr.f32.mxu0 0.0
    %226 = vmatmul.mubr.f32.gmra.mrb[0].mxu0 %v153
    %v227 = vpop.f32.mrb[0].mxu0
    %v228 = vadd.f32 0.0, %v227
    %v229 = vpop.f32.mrb[0].mxu0
    %v230 = vadd.f32 0.0, %v229
    %231 = vdwg.mxu0
    %232 = vst [vmem:[#allocation7] sm:$0x3f] %v228
    %vm233 = vcmask 783360
    %234 = vst.msk [vmem:[#allocation7 + $0x8] sm:$0x3f] %vm233, %v230
    %v235 = vld [vmem:[#allocation2] sm:$0x38]
    %v236 = vld [vmem:[#allocation2 + $0x8] sm:$0x38]
    %v237 = vld [vmem:[#allocation2 + $0x10] sm:$0x38]
    %v240 = vrot.slane %v235, 3
    %v241 = vrot.slane %v236, 3
    %244 = vrot.lane.b32.xlu0 %v235, 127
    %v245 = vpop.permute.xlu0 %244
    %246 = vrot.lane.b32.xlu0 %v236, 127
    %v247 = vpop.permute.xlu0 %246
    %v248 = vsel %vm48, %v245, %v247
    %v251 = vrot.slane %v235, 5
    %v252 = vrot.slane %v236, 5
    %253 = vrot.lane.b32.xlu0 %v251, 126
    %v254 = vpop.permute.xlu0 %253
    %255 = vrot.lane.b32.xlu0 %v252, 126
    %v256 = vpop.permute.xlu0 %255
    %v257 = vsel %vm58, %v254, %v256
    %v260 = vrot.slane %v235, 2
    %v261 = vrot.slane %v236, 2
    %262 = vrot.lane.b32.xlu0 %v260, 112
    %v263 = vpop.permute.xlu0 %262
    %264 = vrot.lane.b32.xlu0 %v261, 112
    %v265 = vpop.permute.xlu0 %264
    %v266 = vsel %vm68, %v263, %v265
    %v269 = vrot.slane %v235, 7
    %v270 = vrot.slane %v236, 7
    %271 = vrot.lane.b32.xlu0 %v269, 111
    %v272 = vpop.permute.xlu0 %271
    %273 = vrot.lane.b32.xlu0 %v270, 111
    %v274 = vpop.permute.xlu0 %273
    %v275 = vsel %vm78, %v272, %v274
    %v278 = vrot.slane %v235, 4
    %v279 = vrot.slane %v236, 4
    %280 = vrot.lane.b32.xlu0 %v278, 110
    %v281 = vpop.permute.xlu0 %280
    %282 = vrot.lane.b32.xlu0 %v279, 110
    %v283 = vpop.permute.xlu0 %282
    %v284 = vsel %vm88, %v281, %v283
    %v287 = vrot.slane %v235, 1
    %v288 = vrot.slane %v236, 1
    %289 = vrot.lane.b32.xlu0 %v287, 96
    %v290 = vpop.permute.xlu0 %289
    %291 = vrot.lane.b32.xlu0 %v288, 96
    %v292 = vpop.permute.xlu0 %291
    %v293 = vsel %vm98, %v290, %v292
    %v297 = vrot.slane %v235, 6
    %v298 = vrot.slane %v236, 6
    %v299 = vrot.slane %v237, 6
    %300 = vrot.lane.b32.xlu0 %v297, 95
    %v301 = vpop.permute.xlu0 %300
    %302 = vrot.lane.b32.xlu0 %v298, 95
    %v303 = vpop.permute.xlu0 %302
    %304 = vrot.lane.b32.xlu0 %v299, 95
    %v305 = vpop.permute.xlu0 %304
    %v306 = vsel %vm112, %v301, %v303
    %v307 = vsel %vm112, %v303, %v305
    %v310 = vrot.slane %v237, 3
    %311 = vrot.lane.b32.xlu0 %v240, 94
    %v312 = vpop.permute.xlu0 %311
    %313 = vrot.lane.b32.xlu0 %v241, 94
    %v314 = vpop.permute.xlu0 %313
    %315 = vrot.lane.b32.xlu0 %v310, 94
    %v316 = vpop.permute.xlu0 %315
    %v317 = vsel %vm123, %v312, %v314
    %v318 = vsel %vm123, %v314, %v316
    %v321 = vsel %vm128, %v240, %v248
    %v322 = vsel %vm128, %v241, %v247
    %v323 = vsel %vm131, %v321, %v257
    %v324 = vsel %vm131, %v322, %v256
    %v325 = vsel %vm134, %v257, %v266
    %v326 = vsel %vm134, %v256, %v265
    %v327 = vsel %vm137, %v325, %v275
    %v328 = vsel %vm137, %v326, %v274
    %v329 = vsel %vm140, %v327, %v284
    %v330 = vsel %vm140, %v328, %v283
    %v331 = vsel %vm143, %v284, %v293
    %v332 = vsel %vm143, %v283, %v292
    %v333 = vsel %vm146, %v331, %v306
    %v334 = vsel %vm146, %v332, %v307
    %v335 = vsel %vm128, %v317, 1.0
    %v336 = vsel %vm128, %v318, 1.0
    %v338 = vsel %vm137, %v335, 0
    %v341 = vsel %vm137, %v336, 0
    %343 = vmatprep.subr.mxu0 %v324
    %344 = vmatpush1.msra.mxu0 %v323
    %345 = vmatprep.subr.mxu0 %v330
    %346 = vmatpush1.msra.mxu0 %v329
    %347 = vmatprep.subr.mxu0 %v334
    %348 = vmatpush1.msra.mxu0 %v333
    %349 = vmatprep.subr.mxu0 %v341
    %350 = vmatpush1.msra.mxu0 %v338
    %351 = vmatprep.subr.mxu0 0.0
    %352 = vmatpush1.msra.mxu0 0.0
    %353 = vmatprep.subr.mxu0 0.0
    %354 = vmatpush1.msra.mxu0 0.0
    %355 = vmatprep.subr.mxu0 0.0
    %356 = vmatpush1.msra.mxu0 0.0
    %357 = vmatprep.subr.mxu0 0.0
    %358 = vmatpush1.msra.mxu0 0.0
    %359 = vmatprep.subr.mxu0 0.0
    %360 = vmatpush1.msra.mxu0 0.0
    %361 = vmatprep.subr.mxu0 0.0
    %362 = vmatpush1.msra.mxu0 0.0
    %363 = vmatprep.subr.mxu0 0.0
    %364 = vmatpush1.msra.mxu0 0.0
    %365 = vmatprep.subr.mxu0 0.0
    %366 = vmatpush1.msra.mxu0 0.0
    %367 = vmatprep.subr.mxu0 0.0
    %368 = vmatpush1.msra.mxu0 0.0
    %369 = vmatprep.subr.mxu0 0.0
    %370 = vmatpush1.msra.mxu0 0.0
    %371 = vmatprep.subr.mxu0 0.0
    %372 = vmatpush1.msra.mxu0 0.0
    %373 = vmatprep.subr.mxu0 0.0
    %374 = vmatpush1.msra.mxu0 0.0
    %375 = vmatprep.subr.mxu0 0.0
    %376 = vmatpush1.msra.mxu0 0.0
    %377 = vmatprep.subr.mxu0 0.0
    %378 = vmatpush1.msra.mxu0 0.0
    %379 = vmatprep.subr.mxu0 0.0
    %380 = vmatpush1.msra.mxu0 0.0
    %381 = vmatprep.subr.mxu0 0.0
    %382 = vmatpush1.msra.mxu0 0.0
    %383 = vmatprep.subr.mxu0 0.0
    %384 = vmatpush1.msra.mxu0 0.0
    %385 = vmatprep.subr.mxu0 0.0
    %386 = vmatpush1.msra.mxu0 0.0
    %387 = vmatprep.subr.mxu0 0.0
    %388 = vmatpush1.msra.mxu0 0.0
    %389 = vmatprep.subr.mxu0 0.0
    %390 = vmatpush1.msra.mxu0 0.0
    %391 = vmatprep.subr.mxu0 0.0
    %392 = vmatpush1.msra.mxu0 0.0
    %393 = vmatprep.subr.mxu0 0.0
    %394 = vmatpush1.msra.mxu0 0.0
    %395 = vmatprep.subr.mxu0 0.0
    %396 = vmatpush1.msra.mxu0 0.0
    %397 = vmatprep.subr.mxu0 0.0
    %398 = vmatpush1.msra.mxu0 0.0
    %399 = vmatprep.subr.mxu0 0.0
    %400 = vmatpush1.msra.mxu0 0.0
    %401 = vmatprep.subr.mxu0 0.0
    %402 = vmatpush1.msra.mxu0 0.0
    %403 = vmatprep.subr.mxu0 0.0
    %404 = vmatpush1.msra.mxu0 0.0
    %405 = vmatprep.subr.mxu0 0.0
    %406 = vmatpush1.msra.mxu0 0.0
    %407 = vmatprep.mubr.f32.mxu0 0.0
    %408 = vmatmul.mubr.f32.gmra.mrb[0].mxu0 %v153
    %v409 = vpop.f32.mrb[0].mxu0
    %v410 = vadd.f32 0.0, %v409
    %v411 = vpop.f32.mrb[0].mxu0
    %v412 = vadd.f32 0.0, %v411
    %413 = vdwg.mxu0
    %v416 = vrot.slane %v410, 2
    %v417 = vrot.slane %v412, 2
    %420 = vst [vmem:[#allocation7] sm:$0xc0] %v416
    %vm421 = vcmask 785414
    %422 = vst.msk [vmem:[#allocation7 + $0x8] sm:$0xc0] %vm421, %v417
    %423 = vst [vmem:[#allocation7 + $0x10] sm:$0xf] %v416
    %vm424 = vcmask 781312
    %425 = vst.msk [vmem:[#allocation7 + $0x18] sm:$0xf] %vm424, %v417
    // Predicated region
    $region18: #{tpu_custom_call.1} parent=1 // pred_check
      _
    $region19: #{tpu_custom_call.1} parent=1 // pred_check_branch
      %427 = sbr.rel (0) target = $region21
    $region20: #{tpu_custom_call.1} parent=1 // pred_region
      %s429 = ssub.s32 512, 512
      %430 = vsyncadd [#allocation4], %s429
      %s431 = sshll.u32 [#allocation7], 4
      %s432 = int_to_ptr.vmem [resolvable:$true] %s431
      %437 = dma.vmem_to_hbm [thread:$0]  %s432, 512, %s2, [#allocation4], 256, 256, 16
    $region21: #{tpu_custom_call.1} parent=1 // pred_fallthru
      _
    // Predicated region
    $region22: #{tpu_custom_call.1} parent=1 // pred_check
      _
    $region23: #{tpu_custom_call.1} parent=1 // pred_check_branch
      %439 = sbr.rel (0) target = $region25
    $region24: #{tpu_custom_call.1} parent=1 // pred_region
      %440 = dma.done [#allocation4], 512
    $region25: #{tpu_custom_call.1} parent=1 // pred_fallthru
      _
    %441 = vsyncpa [#allocation3], 1
    %442 = vsyncpa [#allocation6], 1
    %443 = vsyncpa [#allocation4], 1

</llo_original>
